<compile_context>
chip_gen: v6e
topology: v6e:2x2x1
jax: 0.10.0
libtpu: 0.0.40
codegen_flags: <defaults>
</compile_context>

<pallas_src>
import functools
import math

import jax
import jax.numpy as jnp
from jax.experimental import pallas as pl
from jax.experimental.pallas import tpu as pltpu

_HIDDEN = 64           # per-branch hidden width (PyTorch spec)
_FUSED = 2 * _HIDDEN   # 128 — fused (policy | value) width, one full MXU tile
_HEAD_W = 128          # fused head-weight width (mean in lanes 0..A-1, value in lane A)
_HALF_LOG_2PI = 0.5 * math.log(2.0 * math.pi)


def _round_up(x, m):
    return (x + m - 1) // m * m


def _choose_tb(B, S, A):
    """Per-grid-step batch tile.

    Small batches run as a single (or minimally padded) block; larger batches
    use a VMEM-aware tile that stays well under the default scoped-VMEM budget
    on every generation (incl. v7x's 64 MiB physical / 32 MiB default scope).
    Batches >= 1024 get at least two grid steps so both v7x TensorCores work.
    """
    budget = 16 << 20  # bytes, conservative
    weights = 4 * (S * _FUSED + _FUSED * _FUSED + _FUSED * _HEAD_W + 4 * _FUSED)
    # double-buffered streams (obs / noise / out) + f32 intermediates (h, latent, head)
    per_row = 4 * (2 * S + 2 * A + 2 * (A + 2) + 3 * _FUSED)
    cap = (budget - weights) // per_row
    cap = max(8, min(2048, cap - cap % 8))
    if B <= 8:
        return 8                              # minimum sublane tile
    if B <= cap:
        if B >= 1024:                         # split so both v7x cores get work
            return min(cap, _round_up(-(-B // 2), 8))
        return B                              # single full-dim block, no padding
    return cap


def policy_forward_kernel(obs_ref, noise_ref,
                          w1_ref, b1_ref, w2_ref, b2_ref,
                          wh_ref, bh_ref, std_ref, lp_const_ref,
                          out_ref, *, action_dim):
    A = action_dim
    obs = obs_ref[...]                                           # [TB, S]

    # layer 1 (policy | value fused):  [TB, S] @ [S, 128]
    h = jnp.tanh(
        jnp.dot(obs, w1_ref[...], preferred_element_type=jnp.float32)
        + b1_ref[...])
    # layer 2 (block-diagonal):        [TB, 128] @ [128, 128]
    latent = jnp.tanh(
        jnp.dot(h, w2_ref[...], preferred_element_type=jnp.float32)
        + b2_ref[...])
    # fused heads: lanes 0..A-1 = mean_actions, lane A = value
    head = (jnp.dot(latent, wh_ref[...], preferred_element_type=jnp.float32)
            + bh_ref[...])                                       # [TB, 128]

    mean = head[:, :A]                                           # [TB, A]
    value = head[:, A:A + 1]                                     # [TB, 1]

    noise = noise_ref[...]                                       # [TB, A] (narrow)
    gaussian = mean + std_ref[...] * noise                       # std precomputed
    actions = jnp.tanh(gaussian)

    # log-prob: z == noise exactly (gaussian = mean + std*noise), and the
    # lane-constant Normal-pdf terms (-log_std - 0.5*log(2*pi)) are folded
    # into the precomputed scalar lp_const.
    lp_terms = -0.5 * noise * noise - jnp.log(1.0 - actions * actions + 1e-6)
    log_prob = jnp.sum(lp_terms, axis=-1, keepdims=True) + lp_const_ref[...]

    # narrow packed output: [actions | value | log_prob]  (width A + 2)
    out_ref[:, :A] = actions
    out_ref[:, A:A + 1] = value
    out_ref[:, A + 1:A + 2] = log_prob


def fuse_params(params):
    """One-time parameter fusion (call once at init, NOT per forward step)."""
    f32 = jnp.float32
    A = params["w_act"].shape[1]
    assert A + 1 <= _HEAD_W, "action_dim too large for the fused 128-wide head"

    w1 = jnp.concatenate([params["w_pi1"], params["w_vf1"]], axis=1)   # [S, 128]
    b1 = jnp.concatenate([params["b_pi1"], params["b_vf1"]], axis=1)   # [1, 128]
    z64 = jnp.zeros((_HIDDEN, _HIDDEN), f32)
    w2 = jnp.block([[params["w_pi2"], z64],
                    [z64, params["w_vf2"]]])                           # [128, 128]
    b2 = jnp.concatenate([params["b_pi2"], params["b_vf2"]], axis=1)   # [1, 128]
    wh = jnp.zeros((_FUSED, _HEAD_W), f32)
    wh = wh.at[:_HIDDEN, :A].set(params["w_act"])
    wh = wh.at[_HIDDEN:, A].set(params["w_val"][:, 0])                 # [128, 128]
    bh = jnp.zeros((1, _HEAD_W), f32)
    bh = bh.at[0, :A].set(params["b_act"][0])
    bh = bh.at[0, A].set(params["b_val"][0, 0])
    std = jnp.exp(params["log_std"]).astype(f32)                       # [1, A]
    lp_const = (-(jnp.sum(params["log_std"]) + A * _HALF_LOG_2PI)
                ).reshape(1, 1).astype(f32)                            # [1, 1]
    return dict(w1=w1, b1=b1, w2=w2, b2=b2, wh=wh, bh=bh,
                std=std, lp_const=lp_const)


def policy_forward(obs, fused, noise):
    """obs: [B, state_dim] (or [B, x, y], flattened) f32;
    noise: [B, action_dim] f32 (standard normal); fused = fuse_params(params).
    Returns (actions [B, A], values [B, 1], log_prob [B])."""
    if obs.ndim == 3:
        obs = obs.reshape(obs.shape[0], -1)
    obs = obs.astype(jnp.float32)
    noise = noise.astype(jnp.float32)
    B, S = obs.shape
    A = fused["std"].shape[1]
    out_w = A + 2

    TB = _choose_tb(B, S, A)
    steps = -(-B // TB)
    B_pad = steps * TB
    if B_pad != B:
        # tail-only padding (most PPO batch sizes divide TB and skip this)
        obs = jnp.pad(obs, ((0, B_pad - B), (0, 0)))
        noise = jnp.pad(noise, ((0, B_pad - B), (0, 0)))

    def row_spec(width):
        return pl.BlockSpec((TB, width), lambda i: (i, 0))

    def const_spec(shape):
        return pl.BlockSpec(shape, lambda i: (0, 0))

    out = pl.pallas_call(
        functools.partial(policy_forward_kernel, action_dim=A),
        out_shape=jax.ShapeDtypeStruct((B_pad, out_w), jnp.float32),
        grid_spec=pltpu.PrefetchScalarGridSpec(
            num_scalar_prefetch=0,
            grid=(steps,),
            in_specs=[
                row_spec(S),                     # obs            (streamed)
                row_spec(A),                     # noise, narrow  (streamed)
                const_spec((S, _FUSED)),         # w1 fused       (resident)
                const_spec((1, _FUSED)),         # b1 fused
                const_spec((_FUSED, _FUSED)),    # w2 block-diag
                const_spec((1, _FUSED)),         # b2 fused
                const_spec((_FUSED, _HEAD_W)),   # head weights fused
                const_spec((1, _HEAD_W)),        # head bias fused
                const_spec((1, A)),              # std = exp(log_std)
                const_spec((1, 1)),              # lp_const scalar
            ],
            out_specs=row_spec(out_w),           # narrow packed output slab
        ),
        compiler_params=pltpu.CompilerParams(
            dimension_semantics=("parallel",)),  # batch axis shards across TCs
    )(obs, noise, fused["w1"], fused["b1"], fused["w2"], fused["b2"],
      fused["wh"], fused["bh"], fused["std"], fused["lp_const"])

    actions = out[:B, :A]
    values = out[:B, A:A + 1]
    log_prob = out[:B, A + 1]
    return actions, values, log_prob


def init_policy_params(key, state_dim, action_dim, log_std_init=0.0):
    """Deterministic init mimicking PyTorch nn.Linear default
    (U(-k, k), k = 1/sqrt(fan_in)).  Weights stored as [in, out]."""
    hidden = _HIDDEN

    def linear(key, fan_in, fan_out):
        kw, kb = jax.random.split(key)
        k = 1.0 / math.sqrt(fan_in)
        w = jax.random.uniform(kw, (fan_in, fan_out), jnp.float32, -k, k)
        b = jax.random.uniform(kb, (1, fan_out), jnp.float32, -k, k)
        return w, b

    keys = jax.random.split(key, 6)
    w_pi1, b_pi1 = linear(keys[0], state_dim, hidden)
    w_pi2, b_pi2 = linear(keys[1], hidden, hidden)
    w_vf1, b_vf1 = linear(keys[2], state_dim, hidden)
    w_vf2, b_vf2 = linear(keys[3], hidden, hidden)
    w_val, b_val = linear(keys[4], hidden, 1)
    w_act, b_act = linear(keys[5], hidden, action_dim)
    log_std = jnp.full((1, action_dim), log_std_init, jnp.float32)

    return dict(
        w_pi1=w_pi1, b_pi1=b_pi1, w_pi2=w_pi2, b_pi2=b_pi2,
        w_vf1=w_vf1, b_vf1=b_vf1, w_vf2=w_vf2, b_vf2=b_vf2,
        w_val=w_val, b_val=b_val, w_act=w_act, b_act=b_act,
        log_std=log_std,
    )


def policy_forward_ref(obs, p, noise):
    """Pure-JAX reference (matches PyTorch Policy.forward semantics)."""
    h_pi = jnp.tanh(obs @ p["w_pi1"] + p["b_pi1"])
    latent_pi = jnp.tanh(h_pi @ p["w_pi2"] + p["b_pi2"])
    h_vf = jnp.tanh(obs @ p["w_vf1"] + p["b_vf1"])
    latent_vf = jnp.tanh(h_vf @ p["w_vf2"] + p["b_vf2"])
    values = latent_vf @ p["w_val"] + p["b_val"]
    mean = latent_pi @ p["w_act"] + p["b_act"]
    std = jnp.exp(p["log_std"])
    gaussian = mean + std * noise
    actions = jnp.tanh(gaussian)
    z = (gaussian - mean) / std
    lp = jnp.sum(-0.5 * z * z - p["log_std"] - _HALF_LOG_2PI, axis=-1)
    lp = lp - jnp.sum(jnp.log(1.0 - actions * actions + 1e-6), axis=-1)
    return actions, values, lp


if __name__ == "__main__":
    batch, state_dim, action_dim = 2, 32, 4

    root = jax.random.PRNGKey(0)
    k_params, k_obs, k_noise = jax.random.split(root, 3)

    params = init_policy_params(k_params, state_dim, action_dim, log_std_init=0.0)
    fused = jax.tree_util.tree_map(jax.block_until_ready, fuse_params(params))

    obs = jax.random.normal(k_obs, (batch, state_dim), jnp.float32)
    # Noise drawn outside the kernel (deterministic stand-in for torch sampling);
    # review: in-kernel RNG would load the already-binding EUP slot, so keep it external.
    noise = jax.random.normal(k_noise, (batch, action_dim), jnp.float32)

    fwd = jax.jit(policy_forward)
    actions, values, log_prob = jax.block_until_ready(fwd(obs, fused, noise))

    # self-check against pure-JAX reference
    a_ref, v_ref, lp_ref = policy_forward_ref(obs, params, noise)
    assert jnp.allclose(actions, a_ref, atol=1e-4), "actions mismatch"
    assert jnp.allclose(values, v_ref, atol=1e-4), "values mismatch"
    assert jnp.allclose(log_prob, lp_ref, atol=1e-3), "log_prob mismatch"

    print("KERNEL_OK")
</pallas_src>

<mosaic_0001>
module attributes {stable_mosaic.version = 11 : i64} {
  func.func @policy_forward_kernel(%arg0: i32, %arg1: memref<8x32xf32, #tpu.memory_space<vmem>>, %arg2: memref<8x4xf32, #tpu.memory_space<vmem>>, %arg3: memref<32x128xf32, #tpu.memory_space<vmem>>, %arg4: memref<1x128xf32, #tpu.memory_space<vmem>>, %arg5: memref<128x128xf32, #tpu.memory_space<vmem>>, %arg6: memref<1x128xf32, #tpu.memory_space<vmem>>, %arg7: memref<128x128xf32, #tpu.memory_space<vmem>>, %arg8: memref<1x128xf32, #tpu.memory_space<vmem>>, %arg9: memref<1x4xf32, #tpu.memory_space<vmem>>, %arg10: memref<1x1xf32, #tpu.memory_space<vmem>>, %arg11: memref<8x6xf32, #tpu.memory_space<vmem>>) attributes {dimension_semantics = [#tpu.dimension_semantics<parallel>], iteration_bounds = array<i64: 1>, scalar_prefetch = 0 : i64, scratch_operands = 0 : i64, tpu.core_type = #tpu.core_type<tc>, window_params = [{transform_indices = @transform_0, window_bounds = array<i64: 8, 32>}, {transform_indices = @transform_1, window_bounds = array<i64: 8, 4>}, {pipeline_mode = #tpu.pipeline_mode<synchronous>, transform_indices = @transform_2, window_bounds = array<i64: 32, 128>}, {pipeline_mode = #tpu.pipeline_mode<synchronous>, transform_indices = @transform_3, window_bounds = array<i64: 1, 128>}, {pipeline_mode = #tpu.pipeline_mode<synchronous>, transform_indices = @transform_4, window_bounds = array<i64: 128, 128>}, {pipeline_mode = #tpu.pipeline_mode<synchronous>, transform_indices = @transform_5, window_bounds = array<i64: 1, 128>}, {pipeline_mode = #tpu.pipeline_mode<synchronous>, transform_indices = @transform_6, window_bounds = array<i64: 128, 128>}, {pipeline_mode = #tpu.pipeline_mode<synchronous>, transform_indices = @transform_7, window_bounds = array<i64: 1, 128>}, {pipeline_mode = #tpu.pipeline_mode<synchronous>, transform_indices = @transform_8, window_bounds = array<i64: 1, 4>}, {pipeline_mode = #tpu.pipeline_mode<synchronous>, transform_indices = @transform_9, window_bounds = array<i64: 1, 1>}, {transform_indices = @transform_10, window_bounds = array<i64: 8, 6>}]} {
    %c0 = arith.constant 0 : index
    %c0_0 = arith.constant 0 : index
    %0 = vector.load %arg1[%c0, %c0_0] : memref<8x32xf32, #tpu.memory_space<vmem>>, vector<8x32xf32>
    %c0_1 = arith.constant 0 : index
    %c0_2 = arith.constant 0 : index
    %1 = vector.load %arg3[%c0_1, %c0_2] : memref<32x128xf32, #tpu.memory_space<vmem>>, vector<32x128xf32>
    %cst = arith.constant dense<0.000000e+00> : vector<8x128xf32>
    %2 = tpu.matmul %0, %1, %cst {dimension_numbers = #tpu.dot_dimension_numbers<[1], [0], [0], [1], [0, 0, 1, 1], [], []>} : vector<8x32xf32>, vector<32x128xf32>, vector<8x128xf32> -> vector<8x128xf32>
    %c0_3 = arith.constant 0 : index
    %c0_4 = arith.constant 0 : index
    %3 = vector.load %arg4[%c0_3, %c0_4] : memref<1x128xf32, #tpu.memory_space<vmem>>, vector<1x128xf32>
    %4 = vector.broadcast %3 : vector<1x128xf32> to vector<8x128xf32>
    %5 = arith.addf %2, %4 : vector<8x128xf32>
    %6 = math.tanh %5 : vector<8x128xf32>
    %c0_5 = arith.constant 0 : index
    %c0_6 = arith.constant 0 : index
    %7 = vector.load %arg5[%c0_5, %c0_6] : memref<128x128xf32, #tpu.memory_space<vmem>>, vector<128x128xf32>
    %cst_7 = arith.constant dense<0.000000e+00> : vector<8x128xf32>
    %8 = tpu.matmul %6, %7, %cst_7 {dimension_numbers = #tpu.dot_dimension_numbers<[1], [0], [0], [1], [0, 0, 1, 1], [], []>} : vector<8x128xf32>, vector<128x128xf32>, vector<8x128xf32> -> vector<8x128xf32>
    %c0_8 = arith.constant 0 : index
    %c0_9 = arith.constant 0 : index
    %9 = vector.load %arg6[%c0_8, %c0_9] : memref<1x128xf32, #tpu.memory_space<vmem>>, vector<1x128xf32>
    %10 = vector.broadcast %9 : vector<1x128xf32> to vector<8x128xf32>
    %11 = arith.addf %8, %10 : vector<8x128xf32>
    %12 = math.tanh %11 : vector<8x128xf32>
    %c0_10 = arith.constant 0 : index
    %c0_11 = arith.constant 0 : index
    %13 = vector.load %arg7[%c0_10, %c0_11] : memref<128x128xf32, #tpu.memory_space<vmem>>, vector<128x128xf32>
    %cst_12 = arith.constant dense<0.000000e+00> : vector<8x128xf32>
    %14 = tpu.matmul %12, %13, %cst_12 {dimension_numbers = #tpu.dot_dimension_numbers<[1], [0], [0], [1], [0, 0, 1, 1], [], []>} : vector<8x128xf32>, vector<128x128xf32>, vector<8x128xf32> -> vector<8x128xf32>
    %c0_13 = arith.constant 0 : index
    %c0_14 = arith.constant 0 : index
    %15 = vector.load %arg8[%c0_13, %c0_14] : memref<1x128xf32, #tpu.memory_space<vmem>>, vector<1x128xf32>
    %16 = vector.broadcast %15 : vector<1x128xf32> to vector<8x128xf32>
    %17 = arith.addf %14, %16 : vector<8x128xf32>
    %18 = vector.extract_strided_slice %17 {offsets = [0, 0], sizes = [8, 4], strides = [1, 1]} : vector<8x128xf32> to vector<8x4xf32>
    %19 = vector.extract_strided_slice %17 {offsets = [0, 4], sizes = [8, 1], strides = [1, 1]} : vector<8x128xf32> to vector<8x1xf32>
    %c0_15 = arith.constant 0 : index
    %c0_16 = arith.constant 0 : index
    %20 = vector.load %arg2[%c0_15, %c0_16] : memref<8x4xf32, #tpu.memory_space<vmem>>, vector<8x4xf32>
    %c0_17 = arith.constant 0 : index
    %c0_18 = arith.constant 0 : index
    %21 = vector.load %arg9[%c0_17, %c0_18] : memref<1x4xf32, #tpu.memory_space<vmem>>, vector<1x4xf32>
    %22 = vector.broadcast %21 : vector<1x4xf32> to vector<8x4xf32>
    %23 = arith.mulf %22, %20 : vector<8x4xf32>
    %24 = arith.addf %18, %23 : vector<8x4xf32>
    %25 = math.tanh %24 : vector<8x4xf32>
    %cst_19 = arith.constant -5.000000e-01 : f32
    %26 = vector.broadcast %cst_19 : f32 to vector<8x4xf32>
    %27 = arith.mulf %26, %20 : vector<8x4xf32>
    %28 = arith.mulf %27, %20 : vector<8x4xf32>
    %29 = arith.mulf %25, %25 : vector<8x4xf32>
    %cst_20 = arith.constant 1.000000e+00 : f32
    %30 = vector.broadcast %cst_20 : f32 to vector<8x4xf32>
    %31 = arith.subf %30, %29 : vector<8x4xf32>
    %cst_21 = arith.constant 9.99999997E-7 : f32
    %32 = vector.broadcast %cst_21 : f32 to vector<8x4xf32>
    %33 = arith.addf %31, %32 : vector<8x4xf32>
    %34 = math.log %33 : vector<8x4xf32>
    %35 = arith.subf %28, %34 : vector<8x4xf32>
    %cst_22 = arith.constant dense<0.000000e+00> : vector<8xf32>
    %36 = vector.multi_reduction <add>, %35, %cst_22 [1] : vector<8x4xf32> to vector<8xf32>
    %37 = vector.shape_cast %36 : vector<8xf32> to vector<8x1xf32>
    %c0_23 = arith.constant 0 : index
    %c0_24 = arith.constant 0 : index
    %38 = vector.load %arg10[%c0_23, %c0_24] : memref<1x1xf32, #tpu.memory_space<vmem>>, vector<1x1xf32>
    %39 = vector.broadcast %38 : vector<1x1xf32> to vector<8x1xf32>
    %40 = arith.addf %37, %39 : vector<8x1xf32>
    %c0_25 = arith.constant 0 : index
    %c0_26 = arith.constant 0 : index
    %41 = vector.load %arg11[%c0_25, %c0_26] : memref<8x6xf32, #tpu.memory_space<vmem>>, vector<8x4xf32>
    tpu.vector_store %arg11[%c0_25, %c0_26], %25 {strides = array<i32>} : memref<8x6xf32, #tpu.memory_space<vmem>>, vector<8x4xf32>,
    %c0_27 = arith.constant 0 : index
    %c4 = arith.constant 4 : index
    %42 = vector.load %arg11[%c0_27, %c4] : memref<8x6xf32, #tpu.memory_space<vmem>>, vector<8x1xf32>
    tpu.vector_store %arg11[%c0_27, %c4], %19 {strides = array<i32>} : memref<8x6xf32, #tpu.memory_space<vmem>>, vector<8x1xf32>,
    %c0_28 = arith.constant 0 : index
    %c5 = arith.constant 5 : index
    %43 = vector.load %arg11[%c0_28, %c5] : memref<8x6xf32, #tpu.memory_space<vmem>>, vector<8x1xf32>
    tpu.vector_store %arg11[%c0_28, %c5], %40 {strides = array<i32>} : memref<8x6xf32, #tpu.memory_space<vmem>>, vector<8x1xf32>,
    return
  }
  func.func @transform_0(%arg0: i32) -> (i32, i32) {
    %c0_i32 = arith.constant 0 : i32
    %c0_i32_0 = arith.constant 0 : i32
    return %arg0, %c0_i32 : i32, i32
  }
  func.func @transform_1(%arg0: i32) -> (i32, i32) {
    %c0_i32 = arith.constant 0 : i32
    %c0_i32_0 = arith.constant 0 : i32
    return %arg0, %c0_i32 : i32, i32
  }
  func.func @transform_2(%arg0: i32) -> (i32, i32) {
    %c0_i32 = arith.constant 0 : i32
    %c0_i32_0 = arith.constant 0 : i32
    %c0_i32_1 = arith.constant 0 : i32
    return %c0_i32, %c0_i32_0 : i32, i32
  }
  func.func @transform_3(%arg0: i32) -> (i32, i32) {
    %c0_i32 = arith.constant 0 : i32
    %c0_i32_0 = arith.constant 0 : i32
    %c0_i32_1 = arith.constant 0 : i32
    return %c0_i32, %c0_i32_0 : i32, i32
  }
  func.func @transform_4(%arg0: i32) -> (i32, i32) {
    %c0_i32 = arith.constant 0 : i32
    %c0_i32_0 = arith.constant 0 : i32
    %c0_i32_1 = arith.constant 0 : i32
    return %c0_i32, %c0_i32_0 : i32, i32
  }
  func.func @transform_5(%arg0: i32) -> (i32, i32) {
    %c0_i32 = arith.constant 0 : i32
    %c0_i32_0 = arith.constant 0 : i32
    %c0_i32_1 = arith.constant 0 : i32
    return %c0_i32, %c0_i32_0 : i32, i32
  }
  func.func @transform_6(%arg0: i32) -> (i32, i32) {
    %c0_i32 = arith.constant 0 : i32
    %c0_i32_0 = arith.constant 0 : i32
    %c0_i32_1 = arith.constant 0 : i32
    return %c0_i32, %c0_i32_0 : i32, i32
  }
  func.func @transform_7(%arg0: i32) -> (i32, i32) {
    %c0_i32 = arith.constant 0 : i32
    %c0_i32_0 = arith.constant 0 : i32
    %c0_i32_1 = arith.constant 0 : i32
    return %c0_i32, %c0_i32_0 : i32, i32
  }
  func.func @transform_8(%arg0: i32) -> (i32, i32) {
    %c0_i32 = arith.constant 0 : i32
    %c0_i32_0 = arith.constant 0 : i32
    %c0_i32_1 = arith.constant 0 : i32
    return %c0_i32, %c0_i32_0 : i32, i32
  }
  func.func @transform_9(%arg0: i32) -> (i32, i32) {
    %c0_i32 = arith.constant 0 : i32
    %c0_i32_0 = arith.constant 0 : i32
    %c0_i32_1 = arith.constant 0 : i32
    return %c0_i32, %c0_i32_0 : i32, i32
  }
  func.func @transform_10(%arg0: i32) -> (i32, i32) {
    %c0_i32 = arith.constant 0 : i32
    %c0_i32_0 = arith.constant 0 : i32
    return %arg0, %c0_i32 : i32, i32
  }
}

</mosaic_0001>

<llo_original>
// kernel: policy_forward.1
$region0: #{policy_forward.1}
  #allocation0 [shape = 'u32[]', space=smem, size = 0x4, offset = 0x4, fixed_abs, tag = 'smem constant byte address 0x4 - core index']
  #allocation1 [shape = 'u32[144,128]{1,0:T(1,128)}', space=vmem, size = 0x12000, scoped, tag = 'internal scratch']
  #allocation2 [shape = 'f32[1,1]{1,0:T(1,128)S(1)}', space=vmem, size = 0x200, scoped, tag = 'scoped memory for policy_forward.1']
  %s0 = inlined_call_operand.vmem [shape: f32[8,32], index: 0, kind: input, shape index: {}]
  %s1 = inlined_call_operand.vmem [shape: f32[8,4], index: 1, kind: input, shape index: {}]
  %s2 = inlined_call_operand.vmem [shape: f32[32,128], index: 2, kind: input, shape index: {}]
  %s3 = inlined_call_operand.hbm [shape: f32[1,128], index: 3, kind: input, shape index: {}]
  %s4 = inlined_call_operand.hbm [shape: f32[128,128], index: 4, kind: input, shape index: {}]
  %s5 = inlined_call_operand.hbm [shape: f32[1,128], index: 5, kind: input, shape index: {}]
  %s6 = inlined_call_operand.hbm [shape: f32[128,128], index: 6, kind: input, shape index: {}]
  %s7 = inlined_call_operand.hbm [shape: f32[1,128], index: 7, kind: input, shape index: {}]
  %s8 = inlined_call_operand.hbm [shape: f32[1,4], index: 8, kind: input, shape index: {}]
  %s9 = inlined_call_operand.<no memory space> [shape: f32[1,1], index: 9, kind: input, shape index: {}]
  %s10 = inlined_call_operand.vmem [shape: f32[8,6], index: 10, kind: output, shape index: {}]
  %s11 = sld [smem:[#allocation0]]
  $region74: #{policy_forward.1} parent=0
    _
  %s13 = ssub.s32 1, %s11
  %s14 = scalar_select 0, %s13, %s11
  %v15 = vstv %s9
  %16 = vst [vmem:[#allocation2] sm:$0x1] %v15
  $region1: #{policy_forward.1} parent=0
    #allocation3 [shape = 'u8[512]{0}', space=vmem, size = 0x400, scoped, tag = 'input window, operand 3, single buffered']
    #allocation4 [shape = 's32[1]{0}', space=sflag, size = 0x4, scoped, tag = 'scoped memory for policy_forward.1']
    #allocation5 [shape = 'u8[65536]{0}', space=vmem, size = 0x10000, scoped, tag = 'input window, operand 4, single buffered']
    #allocation6 [shape = 's32[1]{0}', space=sflag, size = 0x4, scoped, tag = 'scoped memory for policy_forward.1']
    #allocation7 [shape = 'u8[512]{0}', space=vmem, size = 0x400, scoped, tag = 'input window, operand 5, single buffered']
    #allocation8 [shape = 'u8[65536]{0}', space=vmem, size = 0x10000, scoped, tag = 'input window, operand 6, single buffered']
    #allocation9 [shape = 's32[1]{0}', space=sflag, size = 0x4, scoped, tag = 'scoped memory for policy_forward.1']
    #allocation10 [shape = 'u8[512]{0}', space=vmem, size = 0x400, scoped, tag = 'input window, operand 7, single buffered']
    #allocation11 [shape = 'u8[512]{0}', space=vmem, size = 0x400, scoped, tag = 'input window, operand 8, single buffered']
    #allocation12 [shape = 's32[1]{0}', space=sflag, size = 0x4, scoped, tag = 'scoped memory for policy_forward.1']
    %17 = vsyncpa [#allocation4], 0
    %18 = vsyncpa [#allocation6], 0
    %19 = vsyncpa [#allocation9], 0
    %20 = vsyncpa [#allocation12], 0
    // Predicated region
    $region2: #{policy_forward.1} parent=1 // pred_check
      _
    $region3: #{policy_forward.1} parent=1 // pred_check_branch
      %22 = sbr.rel (0) target = $region5
    $region4: #{policy_forward.1} parent=1 // pred_region
      _
    $region5: #{policy_forward.1} parent=1 // pred_fallthru
      _
    // Predicated region
    $region6: #{policy_forward.1} parent=1 // pred_check
      _
    $region7: #{policy_forward.1} parent=1 // pred_check_branch
      %24 = sbr.rel (0) target = $region9
    $region8: #{policy_forward.1} parent=1 // pred_region
      _
    $region9: #{policy_forward.1} parent=1 // pred_fallthru
      _
    // Predicated region
    $region10: #{policy_forward.1} parent=1 // pred_check
      _
    $region11: #{policy_forward.1} parent=1 // pred_check_branch
      %26 = sbr.rel (0) target = $region13
    $region12: #{policy_forward.1} parent=1 // pred_region
      _
    $region13: #{policy_forward.1} parent=1 // pred_fallthru
      _
    // Predicated region
    $region14: #{policy_forward.1} parent=1 // pred_check
      _
    $region15: #{policy_forward.1} parent=1 // pred_check_branch
      %28 = sbr.rel (0) target = $region17
    $region16: #{policy_forward.1} parent=1 // pred_region
      %s30 = ssub.s32 16, 16
      %31 = vsyncadd [#allocation4], %s30
      %s33 = sshll.u32 [#allocation3], 4
      %s34 = int_to_ptr.vmem [resolvable:$true] %s33
      %36 = dma.hbm_to_vmem [thread:$0]  %s3, 16, %s34, [#allocation4]
    $region17: #{policy_forward.1} parent=1 // pred_fallthru
      _
    // Predicated region
    $region18: #{policy_forward.1} parent=1 // pred_check
      _
    $region19: #{policy_forward.1} parent=1 // pred_check_branch
      %38 = sbr.rel (0) target = $region21
    $region20: #{policy_forward.1} parent=1 // pred_region
      %s40 = ssub.s32 2048, 2048
      %41 = vsyncadd [#allocation6], %s40
      %s42 = sshll.u32 [#allocation5], 4
      %s43 = int_to_ptr.vmem [resolvable:$true] %s42
      %48 = dma.hbm_to_vmem [thread:$0]  %s4, 2048, %s43, [#allocation6], 128, 128, 8
    $region21: #{policy_forward.1} parent=1 // pred_fallthru
      _
    // Predicated region
    $region22: #{policy_forward.1} parent=1 // pred_check
      _
    $region23: #{policy_forward.1} parent=1 // pred_check_branch
      %50 = sbr.rel (0) target = $region25
    $region24: #{policy_forward.1} parent=1 // pred_region
      %s52 = ssub.s32 16, 16
      %53 = vsyncadd [#allocation6], %s52
      %s55 = sshll.u32 [#allocation7], 4
      %s56 = int_to_ptr.vmem [resolvable:$true] %s55
      %58 = dma.hbm_to_vmem [thread:$0]  %s5, 16, %s56, [#allocation6]
    $region25: #{policy_forward.1} parent=1 // pred_fallthru
      _
    // Predicated region
    $region26: #{policy_forward.1} parent=1 // pred_check
      _
    $region27: #{policy_forward.1} parent=1 // pred_check_branch
      %60 = sbr.rel (0) target = $region29
    $region28: #{policy_forward.1} parent=1 // pred_region
      %s62 = ssub.s32 2048, 2048
      %63 = vsyncadd [#allocation9], %s62
      %s64 = sshll.u32 [#allocation8], 4
      %s65 = int_to_ptr.vmem [resolvable:$true] %s64
      %70 = dma.hbm_to_vmem [thread:$0]  %s6, 2048, %s65, [#allocation9], 128, 128, 8
    $region29: #{policy_forward.1} parent=1 // pred_fallthru
      _
    // Predicated region
    $region30: #{policy_forward.1} parent=1 // pred_check
      _
    $region31: #{policy_forward.1} parent=1 // pred_check_branch
      %72 = sbr.rel (0) target = $region33
    $region32: #{policy_forward.1} parent=1 // pred_region
      %s74 = ssub.s32 16, 16
      %75 = vsyncadd [#allocation9], %s74
      %s77 = sshll.u32 [#allocation10], 4
      %s78 = int_to_ptr.vmem [resolvable:$true] %s77
      %80 = dma.hbm_to_vmem [thread:$0]  %s7, 16, %s78, [#allocation9]
    $region33: #{policy_forward.1} parent=1 // pred_fallthru
      _
    // Predicated region
    $region34: #{policy_forward.1} parent=1 // pred_check
      _
    $region35: #{policy_forward.1} parent=1 // pred_check_branch
      %82 = sbr.rel (0) target = $region37
    $region36: #{policy_forward.1} parent=1 // pred_region
      %s84 = ssub.s32 16, 16
      %85 = vsyncadd [#allocation12], %s84
      %s87 = sshll.u32 [#allocation11], 4
      %s88 = int_to_ptr.vmem [resolvable:$true] %s87
      %90 = dma.hbm_to_vmem [thread:$0]  %s8, 16, %s88, [#allocation12]
    $region37: #{policy_forward.1} parent=1 // pred_fallthru
      _
    // Predicated region
    $region38: #{policy_forward.1} parent=1 // pred_check
      _
    $region39: #{policy_forward.1} parent=1 // pred_check_branch
      %92 = sbr.rel (0) target = $region41
    $region40: #{policy_forward.1} parent=1 // pred_region
      _
    $region41: #{policy_forward.1} parent=1 // pred_fallthru
      _
    // Predicated region
    $region42: #{policy_forward.1} parent=1 // pred_check
      _
    $region43: #{policy_forward.1} parent=1 // pred_check_branch
      %94 = sbr.rel (0) target = $region45
    $region44: #{policy_forward.1} parent=1 // pred_region
      %95 = dma.done [#allocation4], 16
    $region45: #{policy_forward.1} parent=1 // pred_fallthru
      _
    // Predicated region
    $region46: #{policy_forward.1} parent=1 // pred_check
      _
    $region47: #{policy_forward.1} parent=1 // pred_check_branch
      %97 = sbr.rel (0) target = $region49
    $region48: #{policy_forward.1} parent=1 // pred_region
      %98 = dma.done [#allocation6], 2048
    $region49: #{policy_forward.1} parent=1 // pred_fallthru
      _
    // Predicated region
    $region50: #{policy_forward.1} parent=1 // pred_check
      _
    $region51: #{policy_forward.1} parent=1 // pred_check_branch
      %100 = sbr.rel (0) target = $region53
    $region52: #{policy_forward.1} parent=1 // pred_region
      %101 = dma.done [#allocation6], 16
    $region53: #{policy_forward.1} parent=1 // pred_fallthru
      _
    // Predicated region
    $region54: #{policy_forward.1} parent=1 // pred_check
      _
    $region55: #{policy_forward.1} parent=1 // pred_check_branch
      %103 = sbr.rel (0) target = $region57
    $region56: #{policy_forward.1} parent=1 // pred_region
      %104 = dma.done [#allocation9], 2048
    $region57: #{policy_forward.1} parent=1 // pred_fallthru
      _
    // Predicated region
    $region58: #{policy_forward.1} parent=1 // pred_check
      _
    $region59: #{policy_forward.1} parent=1 // pred_check_branch
      %106 = sbr.rel (0) target = $region61
    $region60: #{policy_forward.1} parent=1 // pred_region
      %107 = dma.done [#allocation9], 16
    $region61: #{policy_forward.1} parent=1 // pred_fallthru
      _
    // Predicated region
    $region62: #{policy_forward.1} parent=1 // pred_check
      _
    $region63: #{policy_forward.1} parent=1 // pred_check_branch
      %109 = sbr.rel (0) target = $region65
    $region64: #{policy_forward.1} parent=1 // pred_region
      %110 = dma.done [#allocation12], 16
    $region65: #{policy_forward.1} parent=1 // pred_fallthru
      _
    %v111 = vld [vmem:[%s0] sm:$0xff]
    %v112 = vld [vmem:[%s2] sm:$0xff]
    %v113 = vld [vmem:[%s2 + $0x8] sm:$0xff]
    %v114 = vld [vmem:[%s2 + $0x10] sm:$0xff]
    %v115 = vld [vmem:[%s2 + $0x18] sm:$0xff]
    %v116 = vld [vmem:[#allocation3] sm:$0x1]
    %v118 = vlaneseq
    %v119 = vshrl.u32 %v118, 7
    %v120 = vsub.s32 0, %v119
    %v121 = vrot.slane %v116, %v120
    %vm123 = vcmask 261120
    %v125 = vsel %vm123, %v111, 0
    %127 = vmatprep.subr.mxu0 0.0
    %128 = vmatpush1.msra.mxu0 0.0
    %129 = vmatprep.subr.mxu0 0.0
    %130 = vmatpush1.msra.mxu0 0.0
    %131 = vmatprep.subr.mxu0 0.0
    %132 = vmatpush1.msra.mxu0 0.0
    %133 = vmatprep.subr.mxu0 0.0
    %134 = vmatpush1.msra.mxu0 0.0
    %135 = vmatprep.subr.mxu0 0.0
    %136 = vmatpush1.msra.mxu0 0.0
    %137 = vmatprep.subr.mxu0 0.0
    %138 = vmatpush1.msra.mxu0 0.0
    %139 = vmatprep.subr.mxu0 0.0
    %140 = vmatpush1.msra.mxu0 0.0
    %141 = vmatprep.subr.mxu0 0.0
    %142 = vmatpush1.msra.mxu0 0.0
    %143 = vmatprep.subr.mxu0 0.0
    %144 = vmatpush1.msra.mxu0 0.0
    %145 = vmatprep.subr.mxu0 0.0
    %146 = vmatpush1.msra.mxu0 0.0
    %147 = vmatprep.subr.mxu0 0.0
    %148 = vmatpush1.msra.mxu0 0.0
    %149 = vmatprep.subr.mxu0 0.0
    %150 = vmatpush1.msra.mxu0 0.0
    %151 = vmatprep.subr.mxu0 0.0
    %152 = vmatpush1.msra.mxu0 %v115
    %153 = vmatprep.subr.mxu0 0.0
    %154 = vmatpush1.msra.mxu0 %v114
    %155 = vmatprep.subr.mxu0 0.0
    %156 = vmatpush1.msra.mxu0 %v113
    %157 = vmatprep.subr.mxu0 0.0
    %158 = vmatpush1.msra.mxu0 %v112
    %159 = vmatprep.subr.mxu0 0.0
    %160 = vmatpush2.msra.mxu0 0.0
    %161 = vmatprep.subr.mxu0 0.0
    %162 = vmatpush2.msra.mxu0 0.0
    %163 = vmatprep.subr.mxu0 0.0
    %164 = vmatpush2.msra.mxu0 0.0
    %165 = vmatprep.subr.mxu0 0.0
    %166 = vmatpush2.msra.mxu0 0.0
    %167 = vmatprep.subr.mxu0 0.0
    %168 = vmatpush2.msra.mxu0 0.0
    %169 = vmatprep.subr.mxu0 0.0
    %170 = vmatpush2.msra.mxu0 0.0
    %171 = vmatprep.subr.mxu0 0.0
    %172 = vmatpush2.msra.mxu0 0.0
    %173 = vmatprep.subr.mxu0 0.0
    %174 = vmatpush2.msra.mxu0 0.0
    %175 = vmatprep.subr.mxu0 0.0
    %176 = vmatpush2.msra.mxu0 0.0
    %177 = vmatprep.subr.mxu0 0.0
    %178 = vmatpush2.msra.mxu0 0.0
    %179 = vmatprep.subr.mxu0 0.0
    %180 = vmatpush2.msra.mxu0 0.0
    %181 = vmatprep.subr.mxu0 0.0
    %182 = vmatpush2.msra.mxu0 0.0
    %183 = vmatprep.subr.mxu0 0.0
    %184 = vmatpush2.msra.mxu0 0.0
    %185 = vmatprep.subr.mxu0 0.0
    %186 = vmatpush2.msra.mxu0 0.0
    %187 = vmatprep.subr.mxu0 0.0
    %188 = vmatpush2.msra.mxu0 0.0
    %189 = vmatprep.subr.mxu0 0.0
    %190 = vmatpush2.msra.mxu0 0.0
    %191 = vmatprep.mubr.f32.mxu0 0.0
    %192 = vmatmul.mubr.f32.gmra.mxu0 %v125
    %v193 = vpop.f32.mrf.mxu0
    %v194 = vadd.f32 %v121, %v193
    %v195 = vpop.f32.mrf.mxu0
    %196 = vdwg.mxu0
    %v197 = vtanh.pop %v194
    %v198 = vld [vmem:[#allocation5] sm:$0xff]
    %v199 = vld [vmem:[#allocation5 + $0x8] sm:$0xff]
    %v200 = vld [vmem:[#allocation5 + $0x10] sm:$0xff]
    %v201 = vld [vmem:[#allocation5 + $0x18] sm:$0xff]
    %v202 = vld [vmem:[#allocation5 + $0x20] sm:$0xff]
    %v203 = vld [vmem:[#allocation5 + $0x28] sm:$0xff]
    %v204 = vld [vmem:[#allocation5 + $0x30] sm:$0xff]
    %v205 = vld [vmem:[#allocation5 + $0x38] sm:$0xff]
    %v206 = vld [vmem:[#allocation5 + $0x40] sm:$0xff]
    %v207 = vld [vmem:[#allocation5 + $0x48] sm:$0xff]
    %v208 = vld [vmem:[#allocation5 + $0x50] sm:$0xff]
    %v209 = vld [vmem:[#allocation5 + $0x58] sm:$0xff]
    %v210 = vld [vmem:[#allocation5 + $0x60] sm:$0xff]
    %v211 = vld [vmem:[#allocation5 + $0x68] sm:$0xff]
    %v212 = vld [vmem:[#allocation5 + $0x70] sm:$0xff]
    %v213 = vld [vmem:[#allocation5 + $0x78] sm:$0xff]
    %v214 = vld [vmem:[#allocation7] sm:$0x1]
    %v216 = vlaneseq
    %v217 = vshrl.u32 %v216, 7
    %v218 = vsub.s32 0, %v217
    %v219 = vrot.slane %v214, %v218
    %221 = vmatprep.subr.mxu0 0.0
    %222 = vmatpush1.msra.mxu0 %v213
    %223 = vmatprep.subr.mxu0 0.0
    %224 = vmatpush1.msra.mxu0 %v212
    %225 = vmatprep.subr.mxu0 0.0
    %226 = vmatpush1.msra.mxu0 %v211
    %227 = vmatprep.subr.mxu0 0.0
    %228 = vmatpush1.msra.mxu0 %v210
    %229 = vmatprep.subr.mxu0 0.0
    %230 = vmatpush1.msra.mxu0 %v209
    %231 = vmatprep.subr.mxu0 0.0
    %232 = vmatpush1.msra.mxu0 %v208
    %233 = vmatprep.subr.mxu0 0.0
    %234 = vmatpush1.msra.mxu0 %v207
    %235 = vmatprep.subr.mxu0 0.0
    %236 = vmatpush1.msra.mxu0 %v206
    %237 = vmatprep.subr.mxu0 0.0
    %238 = vmatpush1.msra.mxu0 %v205
    %239 = vmatprep.subr.mxu0 0.0
    %240 = vmatpush1.msra.mxu0 %v204
    %241 = vmatprep.subr.mxu0 0.0
    %242 = vmatpush1.msra.mxu0 %v203
    %243 = vmatprep.subr.mxu0 0.0
    %244 = vmatpush1.msra.mxu0 %v202
    %245 = vmatprep.subr.mxu0 0.0
    %246 = vmatpush1.msra.mxu0 %v201
    %247 = vmatprep.subr.mxu0 0.0
    %248 = vmatpush1.msra.mxu0 %v200
    %249 = vmatprep.subr.mxu0 0.0
    %250 = vmatpush1.msra.mxu0 %v199
    %251 = vmatprep.subr.mxu0 0.0
    %252 = vmatpush1.msra.mxu0 %v198
    %253 = vmatprep.subr.mxu0 0.0
    %254 = vmatpush2.msra.mxu0 0.0
    %255 = vmatprep.subr.mxu0 0.0
    %256 = vmatpush2.msra.mxu0 0.0
    %257 = vmatprep.subr.mxu0 0.0
    %258 = vmatpush2.msra.mxu0 0.0
    %259 = vmatprep.subr.mxu0 0.0
    %260 = vmatpush2.msra.mxu0 0.0
    %261 = vmatprep.subr.mxu0 0.0
    %262 = vmatpush2.msra.mxu0 0.0
    %263 = vmatprep.subr.mxu0 0.0
    %264 = vmatpush2.msra.mxu0 0.0
    %265 = vmatprep.subr.mxu0 0.0
    %266 = vmatpush2.msra.mxu0 0.0
    %267 = vmatprep.subr.mxu0 0.0
    %268 = vmatpush2.msra.mxu0 0.0
    %269 = vmatprep.subr.mxu0 0.0
    %270 = vmatpush2.msra.mxu0 0.0
    %271 = vmatprep.subr.mxu0 0.0
    %272 = vmatpush2.msra.mxu0 0.0
    %273 = vmatprep.subr.mxu0 0.0
    %274 = vmatpush2.msra.mxu0 0.0
    %275 = vmatprep.subr.mxu0 0.0
    %276 = vmatpush2.msra.mxu0 0.0
    %277 = vmatprep.subr.mxu0 0.0
    %278 = vmatpush2.msra.mxu0 0.0
    %279 = vmatprep.subr.mxu0 0.0
    %280 = vmatpush2.msra.mxu0 0.0
    %281 = vmatprep.subr.mxu0 0.0
    %282 = vmatpush2.msra.mxu0 0.0
    %283 = vmatprep.subr.mxu0 0.0
    %284 = vmatpush2.msra.mxu0 0.0
    %285 = vmatprep.mubr.f32.mxu0 0.0
    %286 = vmatmul.mubr.f32.gmra.mxu0 %v197
    %v287 = vpop.f32.mrf.mxu0
    %v288 = vadd.f32 %v219, %v287
    %v289 = vpop.f32.mrf.mxu0
    %290 = vdwg.mxu0
    %v291 = vtanh.pop %v288
    %v292 = vld [vmem:[#allocation8] sm:$0xff]
    %v293 = vld [vmem:[#allocation8 + $0x8] sm:$0xff]
    %v294 = vld [vmem:[#allocation8 + $0x10] sm:$0xff]
    %v295 = vld [vmem:[#allocation8 + $0x18] sm:$0xff]
    %v296 = vld [vmem:[#allocation8 + $0x20] sm:$0xff]
    %v297 = vld [vmem:[#allocation8 + $0x28] sm:$0xff]
    %v298 = vld [vmem:[#allocation8 + $0x30] sm:$0xff]
    %v299 = vld [vmem:[#allocation8 + $0x38] sm:$0xff]
    %v300 = vld [vmem:[#allocation8 + $0x40] sm:$0xff]
    %v301 = vld [vmem:[#allocation8 + $0x48] sm:$0xff]
    %v302 = vld [vmem:[#allocation8 + $0x50] sm:$0xff]
    %v303 = vld [vmem:[#allocation8 + $0x58] sm:$0xff]
    %v304 = vld [vmem:[#allocation8 + $0x60] sm:$0xff]
    %v305 = vld [vmem:[#allocation8 + $0x68] sm:$0xff]
    %v306 = vld [vmem:[#allocation8 + $0x70] sm:$0xff]
    %v307 = vld [vmem:[#allocation8 + $0x78] sm:$0xff]
    %v308 = vld [vmem:[#allocation10] sm:$0x1]
    %v310 = vlaneseq
    %v311 = vshrl.u32 %v310, 7
    %v312 = vsub.s32 0, %v311
    %v313 = vrot.slane %v308, %v312
    %315 = vmatprep.subr.mxu0 0.0
    %316 = vmatpush1.msra.mxu0 %v307
    %317 = vmatprep.subr.mxu0 0.0
    %318 = vmatpush1.msra.mxu0 %v306
    %319 = vmatprep.subr.mxu0 0.0
    %320 = vmatpush1.msra.mxu0 %v305
    %321 = vmatprep.subr.mxu0 0.0
    %322 = vmatpush1.msra.mxu0 %v304
    %323 = vmatprep.subr.mxu0 0.0
    %324 = vmatpush1.msra.mxu0 %v303
    %325 = vmatprep.subr.mxu0 0.0
    %326 = vmatpush1.msra.mxu0 %v302
    %327 = vmatprep.subr.mxu0 0.0
    %328 = vmatpush1.msra.mxu0 %v301
    %329 = vmatprep.subr.mxu0 0.0
    %330 = vmatpush1.msra.mxu0 %v300
    %331 = vmatprep.subr.mxu0 0.0
    %332 = vmatpush1.msra.mxu0 %v299
    %333 = vmatprep.subr.mxu0 0.0
    %334 = vmatpush1.msra.mxu0 %v298
    %335 = vmatprep.subr.mxu0 0.0
    %336 = vmatpush1.msra.mxu0 %v297
    %337 = vmatprep.subr.mxu0 0.0
    %338 = vmatpush1.msra.mxu0 %v296
    %339 = vmatprep.subr.mxu0 0.0
    %340 = vmatpush1.msra.mxu0 %v295
    %341 = vmatprep.subr.mxu0 0.0
    %342 = vmatpush1.msra.mxu0 %v294
    %343 = vmatprep.subr.mxu0 0.0
    %344 = vmatpush1.msra.mxu0 %v293
    %345 = vmatprep.subr.mxu0 0.0
    %346 = vmatpush1.msra.mxu0 %v292
    %347 = vmatprep.subr.mxu0 0.0
    %348 = vmatpush2.msra.mxu0 0.0
    %349 = vmatprep.subr.mxu0 0.0
    %350 = vmatpush2.msra.mxu0 0.0
    %351 = vmatprep.subr.mxu0 0.0
    %352 = vmatpush2.msra.mxu0 0.0
    %353 = vmatprep.subr.mxu0 0.0
    %354 = vmatpush2.msra.mxu0 0.0
    %355 = vmatprep.subr.mxu0 0.0
    %356 = vmatpush2.msra.mxu0 0.0
    %357 = vmatprep.subr.mxu0 0.0
    %358 = vmatpush2.msra.mxu0 0.0
    %359 = vmatprep.subr.mxu0 0.0
    %360 = vmatpush2.msra.mxu0 0.0
    %361 = vmatprep.subr.mxu0 0.0
    %362 = vmatpush2.msra.mxu0 0.0
    %363 = vmatprep.subr.mxu0 0.0
    %364 = vmatpush2.msra.mxu0 0.0
    %365 = vmatprep.subr.mxu0 0.0
    %366 = vmatpush2.msra.mxu0 0.0
    %367 = vmatprep.subr.mxu0 0.0
    %368 = vmatpush2.msra.mxu0 0.0
    %369 = vmatprep.subr.mxu0 0.0
    %370 = vmatpush2.msra.mxu0 0.0
    %371 = vmatprep.subr.mxu0 0.0
    %372 = vmatpush2.msra.mxu0 0.0
    %373 = vmatprep.subr.mxu0 0.0
    %374 = vmatpush2.msra.mxu0 0.0
    %375 = vmatprep.subr.mxu0 0.0
    %376 = vmatpush2.msra.mxu0 0.0
    %377 = vmatprep.subr.mxu0 0.0
    %378 = vmatpush2.msra.mxu0 0.0
    %379 = vmatprep.mubr.f32.mxu0 0.0
    %380 = vmatmul.mubr.f32.gmra.mxu0 %v291
    %v381 = vpop.f32.mrf.mxu0
    %v382 = vadd.f32 %v313, %v381
    %v383 = vpop.f32.mrf.mxu0
    %384 = vdwg.mxu0
    %v385 = vld [vmem:[%s1] sm:$0xff]
    %v386 = vld [vmem:[#allocation11] sm:$0x1]
    %v388 = vlaneseq
    %v389 = vshrl.u32 %v388, 7
    %v390 = vsub.s32 0, %v389
    %v391 = vrot.slane %v386, %v390
    %v393 = vmul.f32 %v391, %v385
    %v394 = vadd.f32 %v382, %v393
    %v395 = vtanh.pop %v394
    %v396 = vmul.f32 %v385, -0.5
    %v397 = vmul.f32 %v396, %v385
    %v398 = vmul.f32 %v395, %v395
    %v399 = vsub.f32 1.0, %v398
    %v400 = vadd.f32 %v399, 1e-06
    %v401 = vlog2.pop %v400
    %v402 = vmul.f32 %v401, 0.6931472
    %v403 = vsub.f32 %v397, %v402
    %vm404 = vcmask 31744
    %v405 = vsel %vm404, %v403, 0.0
    %406 = vadd.xlane.f32.xlu0 %v405
    %v407 = vpop.xlane.xlu0 %406
    %v408 = vld [vmem:[#allocation2] sm:$0x1]
    %v410 = vlaneseq
    %v411 = vshrl.u32 %v410, 7
    %v412 = vsub.s32 0, %v411
    %v413 = vrot.slane %v408, %v412
    %v415 = vadd.f32 %v407, %v413
    %416 = vst.msk [vmem:[%s10] sm:$0xff] %vm404, %v395
    %vm417 = vcmask 39968
    %418 = vst.msk [vmem:[%s10] sm:$0xff] %vm417, %v382
    %420 = vrot.lane.b32.xlu0 %v415, 5
    %v421 = vpop.permute.xlu0 %420
    %vm423 = vcmask 48168
    %424 = vst.msk [vmem:[%s10] sm:$0xff] %vm423, %v421
    // Predicated region
    $region66: #{policy_forward.1} parent=1 // pred_check
      _
    $region67: #{policy_forward.1} parent=1 // pred_check_branch
      %426 = sbr.rel (0) target = $region69
    $region68: #{policy_forward.1} parent=1 // pred_region
      _
    $region69: #{policy_forward.1} parent=1 // pred_fallthru
      _
    // Predicated region
    $region70: #{policy_forward.1} parent=1 // pred_check
      _
    $region71: #{policy_forward.1} parent=1 // pred_check_branch
      %428 = sbr.rel (0) target = $region73
    $region72: #{policy_forward.1} parent=1 // pred_region
      _
    $region73: #{policy_forward.1} parent=1 // pred_fallthru
      _
    %429 = vsyncpa [#allocation4], 1
    %430 = vsyncpa [#allocation6], 1
    %431 = vsyncpa [#allocation9], 1
    %432 = vsyncpa [#allocation12], 1

</llo_original>
